<compile_context>
chip_gen: v7x
topology: tpu7x:2x2x1
jax: 0.10.0
libtpu: 0.0.40
codegen_flags: <defaults>
</compile_context>

<pallas_src>
import jax
import jax.numpy as jnp
from jax.experimental import pallas as pl
from jax.experimental.pallas import tpu as pltpu


def _round_up(n, m):
    return ((n + m - 1) // m) * m


def _mlp_kernel(x_ref, w1_ref, b1_ref, w2_ref, b2_ref, w3_ref, b3_ref, o_ref):
    # Layer 1: cast x to the MXU feed dtype IN-KERNEL (a few VPU pack ops,
    # hidden under the MXU); accumulate in f32; bias + ReLU in f32 on the VPU.
    x = x_ref[...].astype(w1_ref.dtype)
    h = jnp.dot(x, w1_ref[...], preferred_element_type=jnp.float32)
    h = jnp.maximum(h + b1_ref[...], 0.0)

    # Layer 2: same scheme.
    h = jnp.dot(h.astype(w2_ref.dtype), w2_ref[...],
                preferred_element_type=jnp.float32)
    h = jnp.maximum(h + b2_ref[...], 0.0)

    # Head (output_dim == 1), emitted lane-dense as a (1, tb) row:
    #   y = w3 (8, 32) contracted with h (tb, 32) on the feature axis -> (8, tb)
    # This is the q @ k.T-style transposed-RHS contraction, fed straight to the
    # MXU (no XLU transpose of h).  w3 is replicated to 8 sublanes purely for
    # alignment; row 0 carries the real result.  Kept in f32 for accuracy —
    # the MXU has >95% slack at these shapes.
    y8 = jax.lax.dot_general(
        w3_ref[...], h,
        dimension_numbers=(((1,), (1,)), ((), ())),
        preferred_element_type=jnp.float32)                 # (8, tb)
    o_ref[...] = (y8[0:1, :] + b3_ref[0, 0]).astype(o_ref.dtype)


def mlp_regressor_forward(x, params, tile=4096, use_bf16=True):
    """Fused MLP forward.

    params = (w1_t, b1, w2_t, b2, w3_t, b3) with w*_t of shape
    (in_features, out_features) and b* of shape (1, out_features).
    output_dim must be 1 (module default).  use_bf16=False runs the matmuls in
    full f32 to match PyTorch fp32 numerics exactly (negligible perf cost here).
    """
    w1_t, b1, w2_t, b2, w3_t, b3 = params
    batch, in_dim = x.shape
    assert w3_t.shape[1] == 1, "head path assumes output_dim == 1"
    out_dtype = x.dtype

    # Batch tile: big tiles amortize per-grid-step overhead, but keep >= 2 grid
    # steps once batch >= 512 so the "parallel" axis shards across both
    # TensorCores on v7x.
    if batch >= 512:
        tb = min(tile, _round_up(pl.cdiv(batch, 2), 256))
    else:
        tb = _round_up(batch, 8)
    num_tiles = pl.cdiv(batch, tb)

    feed = jnp.bfloat16 if use_bf16 else jnp.float32
    w1_c = w1_t.astype(feed)
    w2_c = w2_t.astype(feed)
    # Head weight row replicated to 8 sublanes (alignment); stays f32.
    w3_8 = jnp.tile(w3_t.reshape(1, -1).astype(jnp.float32), (8, 1))   # (8, 32)
    b1_f = b1.astype(jnp.float32)
    b2_f = b2.astype(jnp.float32)
    b3_s = b3.reshape(1, 1).astype(jnp.float32)                        # SMEM scalar

    def resident(a):
        # Whole-array block with a constant index_map: DMA'd once, stays
        # VMEM-resident across every batch-grid step.
        return pl.BlockSpec(a.shape, lambda i: (0,) * a.ndim)

    res = pl.pallas_call(
        _mlp_kernel,
        out_shape=jax.ShapeDtypeStruct((num_tiles, tb), out_dtype),
        grid=(num_tiles,),
        in_specs=[
            pl.BlockSpec((tb, in_dim), lambda i: (i, 0)),   # x: tiled on batch
            resident(w1_c),
            resident(b1_f),
            resident(w2_c),
            resident(b2_f),
            resident(w3_8),
            pl.BlockSpec(memory_space=pltpu.MemorySpace.SMEM),  # b3 scalar
        ],
        # Lane-dense output: one (1, tb) row per grid step (batch on lanes).
        out_specs=pl.BlockSpec((1, tb), lambda i: (i, 0)),
        compiler_params=pltpu.CompilerParams(
            dimension_semantics=("parallel",),   # megacore sharding on v7x
        ),
    )(x, w1_c, b1_f, w2_c, b2_f, w3_8, b3_s)

    # (num_tiles, tb) row-major already matches batch order: free reshape,
    # then trim the rows that came from out-of-bounds reads of the last tile.
    return res.reshape(-1, 1)[:batch]


def init_params(key, input_dim, hidden_dims=(64, 32), output_dim=1,
                dtype=jnp.float32):
    """Deterministic synthetic init matching nn.Linear's U(-1/sqrt(in), 1/sqrt(in))."""
    dims = [input_dim, *hidden_dims, output_dim]
    params = []
    for i in range(len(dims) - 1):
        fan_in, fan_out = dims[i], dims[i + 1]
        key, kw, kb = jax.random.split(key, 3)
        bound = 1.0 / jnp.sqrt(jnp.array(fan_in, dtype))
        # stored transposed: (in_features, out_features)
        w_t = jax.random.uniform(kw, (fan_in, fan_out), dtype, -bound, bound)
        b = jax.random.uniform(kb, (1, fan_out), dtype, -bound, bound)
        params.extend([w_t, b])
    return tuple(params)


def reference_forward(x, params, use_bf16=True):
    """Pure-JAX reference using the same feed-dtype / f32-accumulate scheme."""
    w1_t, b1, w2_t, b2, w3_t, b3 = params
    feed = jnp.bfloat16 if use_bf16 else jnp.float32
    h = jnp.dot(x.astype(feed), w1_t.astype(feed),
                preferred_element_type=jnp.float32)
    h = jnp.maximum(h + b1, 0.0)
    h = jnp.dot(h.astype(feed), w2_t.astype(feed),
                preferred_element_type=jnp.float32)
    h = jnp.maximum(h + b2, 0.0)
    return jnp.dot(h, w3_t.astype(jnp.float32),
                   preferred_element_type=jnp.float32) + b3


if __name__ == "__main__":
    key = jax.random.PRNGKey(0)
    k_p, k_x1, k_x2 = jax.random.split(key, 3)

    input_dim = 16
    params = init_params(k_p, input_dim, hidden_dims=(64, 32), output_dim=1)

    # Tiny single-tile case (block bigger than the array -> OOB-read rows
    # computed and trimmed).
    x_small = jax.random.normal(k_x1, (6, input_dim), jnp.float32)
    y_small = jax.block_until_ready(mlp_regressor_forward(x_small, params))
    assert y_small.shape == (6, 1)
    assert jnp.allclose(y_small, reference_forward(x_small, params),
                        atol=1e-2, rtol=1e-2)

    # Multi-tile case with a partial last block: exercises the batch grid,
    # VMEM-resident weights, lane-dense output rows and the edge path.
    x_big = jax.random.normal(k_x2, (600, input_dim), jnp.float32)
    y_big = jax.block_until_ready(mlp_regressor_forward(x_big, params))
    assert y_big.shape == (600, 1)
    assert jnp.allclose(y_big, reference_forward(x_big, params),
                        atol=1e-2, rtol=1e-2)

    print("KERNEL_OK")
</pallas_src>

<mosaic_0001>
module attributes {stable_mosaic.version = 11 : i64} {
  func.func @_mlp_kernel(%arg0: i32, %arg1: memref<8x16xf32, #tpu.memory_space<vmem>>, %arg2: memref<16x64xbf16, #tpu.memory_space<vmem>>, %arg3: memref<1x64xf32, #tpu.memory_space<vmem>>, %arg4: memref<64x32xbf16, #tpu.memory_space<vmem>>, %arg5: memref<1x32xf32, #tpu.memory_space<vmem>>, %arg6: memref<8x32xf32, #tpu.memory_space<vmem>>, %arg7: memref<1x1xf32, #tpu.memory_space<smem>>, %arg8: memref<1x8xf32, #tpu.memory_space<vmem>>) attributes {dimension_semantics = [#tpu.dimension_semantics<parallel>], iteration_bounds = array<i64: 1>, scalar_prefetch = 0 : i64, scratch_operands = 0 : i64, tpu.core_type = #tpu.core_type<tc>, window_params = [{transform_indices = @transform_0, window_bounds = array<i64: 8, 16>}, {pipeline_mode = #tpu.pipeline_mode<synchronous>, transform_indices = @transform_1, window_bounds = array<i64: 16, 64>}, {pipeline_mode = #tpu.pipeline_mode<synchronous>, transform_indices = @transform_2, window_bounds = array<i64: 1, 64>}, {pipeline_mode = #tpu.pipeline_mode<synchronous>, transform_indices = @transform_3, window_bounds = array<i64: 64, 32>}, {pipeline_mode = #tpu.pipeline_mode<synchronous>, transform_indices = @transform_4, window_bounds = array<i64: 1, 32>}, {pipeline_mode = #tpu.pipeline_mode<synchronous>, transform_indices = @transform_5, window_bounds = array<i64: 8, 32>}, {transform_indices = @transform_6, window_bounds = array<i64: 1, 1>}, {transform_indices = @transform_7, window_bounds = array<i64: 1, 8>}]} {
    %c0 = arith.constant 0 : index
    %c0_0 = arith.constant 0 : index
    %0 = vector.load %arg1[%c0, %c0_0] : memref<8x16xf32, #tpu.memory_space<vmem>>, vector<8x16xf32>
    %1 = arith.truncf %0 : vector<8x16xf32> to vector<8x16xbf16>
    %c0_1 = arith.constant 0 : index
    %c0_2 = arith.constant 0 : index
    %2 = vector.load %arg2[%c0_1, %c0_2] : memref<16x64xbf16, #tpu.memory_space<vmem>>, vector<16x64xbf16>
    %cst = arith.constant dense<0.000000e+00> : vector<8x64xf32>
    %3 = tpu.matmul %1, %2, %cst {dimension_numbers = #tpu.dot_dimension_numbers<[1], [0], [0], [1], [0, 0, 1, 1], [], []>} : vector<8x16xbf16>, vector<16x64xbf16>, vector<8x64xf32> -> vector<8x64xf32>
    %c0_3 = arith.constant 0 : index
    %c0_4 = arith.constant 0 : index
    %4 = vector.load %arg3[%c0_3, %c0_4] : memref<1x64xf32, #tpu.memory_space<vmem>>, vector<1x64xf32>
    %5 = vector.broadcast %4 : vector<1x64xf32> to vector<8x64xf32>
    %6 = arith.addf %3, %5 : vector<8x64xf32>
    %cst_5 = arith.constant 0.000000e+00 : f32
    %7 = vector.broadcast %cst_5 : f32 to vector<8x64xf32>
    %8 = arith.maximumf %6, %7 : vector<8x64xf32>
    %9 = arith.truncf %8 : vector<8x64xf32> to vector<8x64xbf16>
    %c0_6 = arith.constant 0 : index
    %c0_7 = arith.constant 0 : index
    %10 = vector.load %arg4[%c0_6, %c0_7] : memref<64x32xbf16, #tpu.memory_space<vmem>>, vector<64x32xbf16>
    %cst_8 = arith.constant dense<0.000000e+00> : vector<8x32xf32>
    %11 = tpu.matmul %9, %10, %cst_8 {dimension_numbers = #tpu.dot_dimension_numbers<[1], [0], [0], [1], [0, 0, 1, 1], [], []>} : vector<8x64xbf16>, vector<64x32xbf16>, vector<8x32xf32> -> vector<8x32xf32>
    %c0_9 = arith.constant 0 : index
    %c0_10 = arith.constant 0 : index
    %12 = vector.load %arg5[%c0_9, %c0_10] : memref<1x32xf32, #tpu.memory_space<vmem>>, vector<1x32xf32>
    %13 = vector.broadcast %12 : vector<1x32xf32> to vector<8x32xf32>
    %14 = arith.addf %11, %13 : vector<8x32xf32>
    %cst_11 = arith.constant 0.000000e+00 : f32
    %15 = vector.broadcast %cst_11 : f32 to vector<8x32xf32>
    %16 = arith.maximumf %14, %15 : vector<8x32xf32>
    %c0_12 = arith.constant 0 : index
    %c0_13 = arith.constant 0 : index
    %17 = vector.load %arg6[%c0_12, %c0_13] : memref<8x32xf32, #tpu.memory_space<vmem>>, vector<8x32xf32>
    %cst_14 = arith.constant dense<0.000000e+00> : vector<8x8xf32>
    %18 = tpu.matmul %17, %16, %cst_14 {dimension_numbers = #tpu.dot_dimension_numbers<[1], [1], [0], [0], [0, 0, 1, 0], [], []>} : vector<8x32xf32>, vector<8x32xf32>, vector<8x8xf32> -> vector<8x8xf32>
    %19 = vector.extract_strided_slice %18 {offsets = [0, 0], sizes = [1, 8], strides = [1, 1]} : vector<8x8xf32> to vector<1x8xf32>
    %c0_15 = arith.constant 0 : index
    %c0_16 = arith.constant 0 : index
    %20 = memref.load %arg7[%c0_15, %c0_16] : memref<1x1xf32, #tpu.memory_space<smem>>
    %21 = vector.broadcast %20 : f32 to vector<1x8xf32>
    %22 = arith.addf %19, %21 : vector<1x8xf32>
    %c0_17 = arith.constant 0 : index
    %c0_18 = arith.constant 0 : index
    %23 = vector.load %arg8[%c0_17, %c0_18] : memref<1x8xf32, #tpu.memory_space<vmem>>, vector<1x8xf32>
    tpu.vector_store %arg8[%c0_17, %c0_18], %22 {strides = array<i32>} : memref<1x8xf32, #tpu.memory_space<vmem>>, vector<1x8xf32>,
    return
  }
  func.func @transform_0(%arg0: i32) -> (i32, i32) {
    %c0_i32 = arith.constant 0 : i32
    %c0_i32_0 = arith.constant 0 : i32
    return %arg0, %c0_i32 : i32, i32
  }
  func.func @transform_1(%arg0: i32) -> (i32, i32) {
    %c0_i32 = arith.constant 0 : i32
    %c0_i32_0 = arith.constant 0 : i32
    %c0_i32_1 = arith.constant 0 : i32
    return %c0_i32, %c0_i32_0 : i32, i32
  }
  func.func @transform_2(%arg0: i32) -> (i32, i32) {
    %c0_i32 = arith.constant 0 : i32
    %c0_i32_0 = arith.constant 0 : i32
    %c0_i32_1 = arith.constant 0 : i32
    return %c0_i32, %c0_i32_0 : i32, i32
  }
  func.func @transform_3(%arg0: i32) -> (i32, i32) {
    %c0_i32 = arith.constant 0 : i32
    %c0_i32_0 = arith.constant 0 : i32
    %c0_i32_1 = arith.constant 0 : i32
    return %c0_i32, %c0_i32_0 : i32, i32
  }
  func.func @transform_4(%arg0: i32) -> (i32, i32) {
    %c0_i32 = arith.constant 0 : i32
    %c0_i32_0 = arith.constant 0 : i32
    %c0_i32_1 = arith.constant 0 : i32
    return %c0_i32, %c0_i32_0 : i32, i32
  }
  func.func @transform_5(%arg0: i32) -> (i32, i32) {
    %c0_i32 = arith.constant 0 : i32
    %c0_i32_0 = arith.constant 0 : i32
    %c0_i32_1 = arith.constant 0 : i32
    return %c0_i32, %c0_i32_0 : i32, i32
  }
  func.func @transform_6(%arg0: i32) -> (i32, i32) {
    %c0_i32 = arith.constant 0 : i32
    %c0_i32_0 = arith.constant 0 : i32
    %c0_i32_1 = arith.constant 0 : i32
    return %c0_i32, %c0_i32_0 : i32, i32
  }
  func.func @transform_7(%arg0: i32) -> (i32, i32) {
    %c0_i32 = arith.constant 0 : i32
    %c0_i32_0 = arith.constant 0 : i32
    return %arg0, %c0_i32 : i32, i32
  }
}

</mosaic_0001>

<llo_original>
// kernel: tpu_custom_call.1
$region0: #{tpu_custom_call.1}
  #allocation0 [shape = 'u32[]', space=smem, size = 0x4, offset = 0x4, fixed_abs, tag = 'smem constant byte address 0x4 - core index']
  #allocation1 [shape = 'u32[144,128]{1,0:T(1,128)}', space=vmem, size = 0x12000, scoped, tag = 'internal scratch']
  #allocation2 [shape = 'f32[1,1]{1,0:T(1,128)S(6)}', space=smem, size = 0x200, scoped, tag = 'scoped memory for tpu_custom_call.1']
  %s0 = inlined_call_operand.vmem [shape: f32[6,16], index: 0, kind: input, shape index: {}]
  %s1 = inlined_call_operand.vmem [shape: bf16[16,64], index: 1, kind: input, shape index: {}]
  %s2 = inlined_call_operand.vmem [shape: f32[1,64], index: 2, kind: input, shape index: {}]
  %s3 = inlined_call_operand.vmem [shape: bf16[64,32], index: 3, kind: input, shape index: {}]
  %s4 = inlined_call_operand.vmem [shape: f32[1,32], index: 4, kind: input, shape index: {}]
  %s5 = inlined_call_operand.vmem [shape: f32[8,32], index: 5, kind: input, shape index: {}]
  %s6 = inlined_call_operand.<no memory space> [shape: f32[1,1], index: 6, kind: input, shape index: {}]
  %s7 = inlined_call_operand.hbm [shape: f32[1,8], index: 7, kind: output, shape index: {}]
  %s8 = sld [smem:[#allocation0]]
  $region38: #{tpu_custom_call.1} parent=0
    _
  %s10 = ssub.s32 1, %s8
  %s11 = scalar_select 0, %s10, %s8
  %12 = sst [smem:[#allocation2]] %s6
  $region1: #{tpu_custom_call.1} parent=0
    #allocation3 [shape = 'u8[512]{0}', space=vmem, size = 0x400, scoped, tag = 'output window, operand 0, single buffered']
    #allocation4 [shape = 's32[1]{0}', space=sflag, size = 0x4, scoped, tag = 'scoped memory for tpu_custom_call.1']
    %13 = vsyncpa [#allocation4], 0
    // Predicated region
    $region2: #{tpu_custom_call.1} parent=1 // pred_check
      _
    $region3: #{tpu_custom_call.1} parent=1 // pred_check_branch
      %15 = sbr.rel (0) target = $region5
    $region4: #{tpu_custom_call.1} parent=1 // pred_region
      _
    $region5: #{tpu_custom_call.1} parent=1 // pred_fallthru
      _
    // Predicated region
    $region6: #{tpu_custom_call.1} parent=1 // pred_check
      _
    $region7: #{tpu_custom_call.1} parent=1 // pred_check_branch
      %17 = sbr.rel (0) target = $region9
    $region8: #{tpu_custom_call.1} parent=1 // pred_region
      _
    $region9: #{tpu_custom_call.1} parent=1 // pred_fallthru
      _
    // Predicated region
    $region10: #{tpu_custom_call.1} parent=1 // pred_check
      _
    $region11: #{tpu_custom_call.1} parent=1 // pred_check_branch
      %19 = sbr.rel (0) target = $region13
    $region12: #{tpu_custom_call.1} parent=1 // pred_region
      _
    $region13: #{tpu_custom_call.1} parent=1 // pred_fallthru
      _
    // Predicated region
    $region14: #{tpu_custom_call.1} parent=1 // pred_check
      _
    $region15: #{tpu_custom_call.1} parent=1 // pred_check_branch
      %21 = sbr.rel (0) target = $region17
    $region16: #{tpu_custom_call.1} parent=1 // pred_region
      _
    $region17: #{tpu_custom_call.1} parent=1 // pred_fallthru
      _
    // Predicated region
    $region18: #{tpu_custom_call.1} parent=1 // pred_check
      _
    $region19: #{tpu_custom_call.1} parent=1 // pred_check_branch
      %23 = sbr.rel (0) target = $region21
    $region20: #{tpu_custom_call.1} parent=1 // pred_region
      _
    $region21: #{tpu_custom_call.1} parent=1 // pred_fallthru
      _
    // Predicated region
    $region22: #{tpu_custom_call.1} parent=1 // pred_check
      _
    $region23: #{tpu_custom_call.1} parent=1 // pred_check_branch
      %25 = sbr.rel (0) target = $region25
    $region24: #{tpu_custom_call.1} parent=1 // pred_region
      _
    $region25: #{tpu_custom_call.1} parent=1 // pred_fallthru
      _
    // Predicated region
    $region26: #{tpu_custom_call.1} parent=1 // pred_check
      _
    $region27: #{tpu_custom_call.1} parent=1 // pred_check_branch
      %27 = sbr.rel (0) target = $region29
    $region28: #{tpu_custom_call.1} parent=1 // pred_region
      _
    $region29: #{tpu_custom_call.1} parent=1 // pred_fallthru
      _
    %v29 = vld [vmem:[%s0] sm:$0xff]
    %v30 = vpack.c.bf16 %v29, %v29
    %v31 = vld [vmem:[%s1] sm:$0xf]
    %v32 = vld [vmem:[%s1 + $0x4] sm:$0xf]
    %v33 = vld [vmem:[%s2] sm:$0x1]
    %v35 = vlaneseq
    %v36 = vshrl.u32 %v35, 7
    %v37 = vsub.s32 0, %v36
    %v38 = vrot.slane %v33, %v37
    %v42 = vunpack.c.l.b16 %v31
    %v43 = vunpack.c.l.b16 %v32
    %v44 = vpack.c.b16 %v43, %v42
    %vm46 = vcmask 130048
    %v48 = vsel %vm46, %v30, 0
    %50 = vmatprep.subr.bf16.mxu0 0
    %51 = vmatpush1.bf16.msra.mxu0 %v44
    %52 = vmatprep.subr.bf16.mxu0 0
    %53 = vmatpush1.bf16.msra.mxu0 0
    %54 = vmatprep.subr.bf16.mxu0 0
    %55 = vmatpush1.bf16.msra.mxu0 0
    %56 = vmatprep.subr.bf16.mxu0 0
    %57 = vmatpush1.bf16.msra.mxu0 0
    %58 = vmatprep.subr.bf16.mxu0 0
    %59 = vmatpush1.bf16.msra.mxu0 0
    %60 = vmatprep.subr.bf16.mxu0 0
    %61 = vmatpush1.bf16.msra.mxu0 0
    %62 = vmatprep.subr.bf16.mxu0 0
    %63 = vmatpush1.bf16.msra.mxu0 0
    %64 = vmatprep.subr.bf16.mxu0 0
    %65 = vmatpush1.bf16.msra.mxu0 0
    %66 = vmatprep.subr.bf16.mxu0 0
    %67 = vmatpush1.bf16.msra.mxu0 0
    %68 = vmatprep.subr.bf16.mxu0 0
    %69 = vmatpush1.bf16.msra.mxu0 0
    %70 = vmatprep.subr.bf16.mxu0 0
    %71 = vmatpush1.bf16.msra.mxu0 0
    %72 = vmatprep.subr.bf16.mxu0 0
    %73 = vmatpush1.bf16.msra.mxu0 0
    %74 = vmatprep.subr.bf16.mxu0 0
    %75 = vmatpush1.bf16.msra.mxu0 0
    %76 = vmatprep.subr.bf16.mxu0 0
    %77 = vmatpush1.bf16.msra.mxu0 0
    %78 = vmatprep.subr.bf16.mxu0 0
    %79 = vmatpush1.bf16.msra.mxu0 0
    %80 = vmatprep.subr.bf16.mxu0 0
    %81 = vmatpush1.bf16.msra.mxu0 0
    %82 = vmatprep.mubr.bf16.mxu0 0
    %83 = vmatmul.mubr.bf16.gmra.mrb[0].mxu0 %v48
    %v84 = vpop.f32.mrb[0].mxu0
    %v85 = vadd.f32 %v38, %v84
    %v86 = vpop.f32.mrb[0].mxu0
    %v87 = vpop.f32.mrb[0].mxu0
    %v88 = vpop.f32.mrb[0].mxu0
    %89 = vdwg.mxu0
    %v90 = vmax.f32 %v85, 0.0
    %v91 = vpack.c.bf16 %v90, %v90
    %v92 = vld [vmem:[%s3] sm:$0xf]
    %v93 = vld [vmem:[%s3 + $0x4] sm:$0xf]
    %v94 = vld [vmem:[%s3 + $0x8] sm:$0xf]
    %v95 = vld [vmem:[%s3 + $0xc] sm:$0xf]
    %v96 = vld [vmem:[%s3 + $0x10] sm:$0xf]
    %v97 = vld [vmem:[%s3 + $0x14] sm:$0xf]
    %v98 = vld [vmem:[%s3 + $0x18] sm:$0xf]
    %v99 = vld [vmem:[%s3 + $0x1c] sm:$0xf]
    %v100 = vld [vmem:[%s4] sm:$0x1]
    %v102 = vlaneseq
    %v103 = vshrl.u32 %v102, 7
    %v104 = vsub.s32 0, %v103
    %v105 = vrot.slane %v100, %v104
    %v115 = vunpack.c.l.b16 %v92
    %v116 = vunpack.c.l.b16 %v93
    %v117 = vunpack.c.l.b16 %v94
    %v118 = vunpack.c.l.b16 %v95
    %v119 = vunpack.c.l.b16 %v96
    %v120 = vunpack.c.l.b16 %v97
    %v121 = vunpack.c.l.b16 %v98
    %v122 = vunpack.c.l.b16 %v99
    %v123 = vpack.c.b16 %v116, %v115
    %v124 = vpack.c.b16 %v118, %v117
    %v125 = vpack.c.b16 %v120, %v119
    %v126 = vpack.c.b16 %v122, %v121
    %vm131 = vcmask 523264
    %v133 = vsel %vm131, %v91, 0
    %135 = vmatprep.subr.bf16.mxu0 0
    %136 = vmatpush1.bf16.msra.mxu0 %v123
    %137 = vmatprep.subr.bf16.mxu0 0
    %138 = vmatpush1.bf16.msra.mxu0 %v124
    %139 = vmatprep.subr.bf16.mxu0 0
    %140 = vmatpush1.bf16.msra.mxu0 %v125
    %141 = vmatprep.subr.bf16.mxu0 0
    %142 = vmatpush1.bf16.msra.mxu0 %v126
    %143 = vmatprep.subr.bf16.mxu0 0
    %144 = vmatpush1.bf16.msra.mxu0 0
    %145 = vmatprep.subr.bf16.mxu0 0
    %146 = vmatpush1.bf16.msra.mxu0 0
    %147 = vmatprep.subr.bf16.mxu0 0
    %148 = vmatpush1.bf16.msra.mxu0 0
    %149 = vmatprep.subr.bf16.mxu0 0
    %150 = vmatpush1.bf16.msra.mxu0 0
    %151 = vmatprep.subr.bf16.mxu0 0
    %152 = vmatpush1.bf16.msra.mxu0 0
    %153 = vmatprep.subr.bf16.mxu0 0
    %154 = vmatpush1.bf16.msra.mxu0 0
    %155 = vmatprep.subr.bf16.mxu0 0
    %156 = vmatpush1.bf16.msra.mxu0 0
    %157 = vmatprep.subr.bf16.mxu0 0
    %158 = vmatpush1.bf16.msra.mxu0 0
    %159 = vmatprep.subr.bf16.mxu0 0
    %160 = vmatpush1.bf16.msra.mxu0 0
    %161 = vmatprep.subr.bf16.mxu0 0
    %162 = vmatpush1.bf16.msra.mxu0 0
    %163 = vmatprep.subr.bf16.mxu0 0
    %164 = vmatpush1.bf16.msra.mxu0 0
    %165 = vmatprep.subr.bf16.mxu0 0
    %166 = vmatpush1.bf16.msra.mxu0 0
    %167 = vmatprep.mubr.bf16.mxu0 0
    %168 = vmatmul.mubr.bf16.gmra.mrb[0].mxu0 %v133
    %v169 = vpop.f32.mrb[0].mxu0
    %v170 = vadd.f32 %v105, %v169
    %v171 = vpop.f32.mrb[0].mxu0
    %v172 = vpop.f32.mrb[0].mxu0
    %v173 = vpop.f32.mrb[0].mxu0
    %174 = vdwg.mxu0
    %v175 = vmax.f32 %v170, 0.0
    %v176 = vld [vmem:[%s5] sm:$0xff]
    %vm177 = vcmask 261120
    %v179 = vsel %vm177, %v176, 0
    %v182 = vsel %vm177, %v175, 0
    %184 = vmatprep.subr.mxu0 0.0
    %185 = vmatpush1.xpose.msra.mxu0 %v182
    %186 = vmatprep.subr.mxu0 0.0
    %187 = vmatpush1.xpose.msra.mxu0 0.0
    %188 = vmatprep.subr.mxu0 0.0
    %189 = vmatpush1.xpose.msra.mxu0 0.0
    %190 = vmatprep.subr.mxu0 0.0
    %191 = vmatpush1.xpose.msra.mxu0 0.0
    %192 = vmatprep.subr.mxu0 0.0
    %193 = vmatpush1.xpose.msra.mxu0 0.0
    %194 = vmatprep.subr.mxu0 0.0
    %195 = vmatpush1.xpose.msra.mxu0 0.0
    %196 = vmatprep.subr.mxu0 0.0
    %197 = vmatpush1.xpose.msra.mxu0 0.0
    %198 = vmatprep.subr.mxu0 0.0
    %199 = vmatpush1.xpose.msra.mxu0 0.0
    %200 = vmatprep.subr.mxu0 0.0
    %201 = vmatpush1.xpose.msra.mxu0 0.0
    %202 = vmatprep.subr.mxu0 0.0
    %203 = vmatpush1.xpose.msra.mxu0 0.0
    %204 = vmatprep.subr.mxu0 0.0
    %205 = vmatpush1.xpose.msra.mxu0 0.0
    %206 = vmatprep.subr.mxu0 0.0
    %207 = vmatpush1.xpose.msra.mxu0 0.0
    %208 = vmatprep.subr.mxu0 0.0
    %209 = vmatpush1.xpose.msra.mxu0 0.0
    %210 = vmatprep.subr.mxu0 0.0
    %211 = vmatpush1.xpose.msra.mxu0 0.0
    %212 = vmatprep.subr.mxu0 0.0
    %213 = vmatpush1.xpose.msra.mxu0 0.0
    %214 = vmatprep.subr.mxu0 0.0
    %215 = vmatpush1.xpose.msra.mxu0 0.0
    %216 = vmatprep.subr.mxu0 0.0
    %217 = vmatpush1.xpose.msra.mxu0 0.0
    %218 = vmatprep.subr.mxu0 0.0
    %219 = vmatpush1.xpose.msra.mxu0 0.0
    %220 = vmatprep.subr.mxu0 0.0
    %221 = vmatpush1.xpose.msra.mxu0 0.0
    %222 = vmatprep.subr.mxu0 0.0
    %223 = vmatpush1.xpose.msra.mxu0 0.0
    %224 = vmatprep.subr.mxu0 0.0
    %225 = vmatpush1.xpose.msra.mxu0 0.0
    %226 = vmatprep.subr.mxu0 0.0
    %227 = vmatpush1.xpose.msra.mxu0 0.0
    %228 = vmatprep.subr.mxu0 0.0
    %229 = vmatpush1.xpose.msra.mxu0 0.0
    %230 = vmatprep.subr.mxu0 0.0
    %231 = vmatpush1.xpose.msra.mxu0 0.0
    %232 = vmatprep.subr.mxu0 0.0
    %233 = vmatpush1.xpose.msra.mxu0 0.0
    %234 = vmatprep.subr.mxu0 0.0
    %235 = vmatpush1.xpose.msra.mxu0 0.0
    %236 = vmatprep.subr.mxu0 0.0
    %237 = vmatpush1.xpose.msra.mxu0 0.0
    %238 = vmatprep.subr.mxu0 0.0
    %239 = vmatpush1.xpose.msra.mxu0 0.0
    %240 = vmatprep.subr.mxu0 0.0
    %241 = vmatpush1.xpose.msra.mxu0 0.0
    %242 = vmatprep.subr.mxu0 0.0
    %243 = vmatpush1.xpose.msra.mxu0 0.0
    %244 = vmatprep.subr.mxu0 0.0
    %245 = vmatpush1.xpose.msra.mxu0 0.0
    %246 = vmatprep.subr.mxu0 0.0
    %247 = vmatpush1.xpose.msra.mxu0 0.0
    %248 = vmatprep.mubr.f32.mxu0 0.0
    %249 = vmatmul.mubr.f32.gmra.mrb[0].mxu0 %v179
    %v250 = vpop.f32.mrb[0].mxu0
    %v251 = vadd.f32 0.0, %v250
    %v252 = vpop.f32.mrb[0].mxu0
    %253 = vdwg.mxu0
    %s254 = sld [smem:[#allocation2]]
    %v255 = vstv %s254
    %v256 = vadd.f32 %v251, %v255
    %vm257 = vcmask 57344
    %258 = vst.msk [vmem:[#allocation3] sm:$0x1] %vm257, %v256
    // Predicated region
    $region30: #{tpu_custom_call.1} parent=1 // pred_check
      _
    $region31: #{tpu_custom_call.1} parent=1 // pred_check_branch
      %260 = sbr.rel (0) target = $region33
    $region32: #{tpu_custom_call.1} parent=1 // pred_region
      %s262 = ssub.s32 16, 16
      %263 = vsyncadd [#allocation4], %s262
      %s265 = sshll.u32 [#allocation3], 4
      %s266 = int_to_ptr.vmem [resolvable:$true] %s265
      %268 = dma.vmem_to_hbm [thread:$0]  %s266, 16, %s7, [#allocation4]
    $region33: #{tpu_custom_call.1} parent=1 // pred_fallthru
      _
    // Predicated region
    $region34: #{tpu_custom_call.1} parent=1 // pred_check
      _
    $region35: #{tpu_custom_call.1} parent=1 // pred_check_branch
      %270 = sbr.rel (0) target = $region37
    $region36: #{tpu_custom_call.1} parent=1 // pred_region
      %271 = dma.done [#allocation4], 16
    $region37: #{tpu_custom_call.1} parent=1 // pred_fallthru
      _
    %272 = vsyncpa [#allocation4], 1

</llo_original>
